<compile_context>
chip_gen: v7x
topology: tpu7x:2x2x1
jax: 0.10.0
libtpu: 0.0.40
codegen_flags: <defaults>
</compile_context>

<pallas_src>
import math

import jax
import jax.numpy as jnp
from jax import lax
from jax.experimental import pallas as pl
from jax.experimental.pallas import tpu as pltpu


_MAX_STATIC_CHUNKS = 8   # static unroll at most 8 chunks (<= ~64 steps)


def _pick_u(t_tile, h):
    """Steps per inner chunk: smallest count whose concatenated store is
    lane-aligned ((u*h) % 128 == 0), scaled up to ~8 steps; divides t_tile."""
    base = 128 // math.gcd(h, 128)
    divisors = [d for d in range(1, min(t_tile, 16) + 1) if t_tile % d == 0]
    aligned = [d for d in divisors if d % base == 0]
    pool = aligned if aligned else divisors
    small = [d for d in pool if d <= 8]
    return max(small) if small else min(pool)


def _pick_t_tile(t_total, h, b, max_unroll=64):
    """Largest divisor of T with a bounded unroll and bounded VMEM slab,
    preferring lane-aligned output slabs. Never falls back to t_tile == T for
    long sequences (cap at max_unroll)."""
    budget = 4 << 20                       # per-output-buffer VMEM budget
    rows = max(b, 8)                       # sublane padding
    cap = max(1, budget // (2 * rows * h * 4))
    cap = min(cap, max_unroll, t_total)
    best_any, best_aligned = 1, None
    for tt in range(1, cap + 1):
        if t_total % tt:
            continue
        best_any = tt
        if (tt * h) % 128 == 0:
            best_aligned = tt
    return best_aligned if best_aligned is not None else best_any


def _lstm_kernel(x_ref, whh_ref, wih_ref, bias_ref, out_ref, hn_ref, cn_ref):
    # x_ref   : (t_tile, B, 1)   time-major input tile
    # whh_ref : (H, 4H)          recurrent weights (gate order [i, f, o, g])
    # wih_ref : (1, 4H)          input weights row (input_size == 1)
    # bias_ref: (1, 4H)          b_ih + b_hh
    # out_ref : (B, t_tile*H)    lane-dense flat output slab
    # hn_ref, cn_ref : (B, H)    final state outputs; double as the VMEM
    #                            carry across the time grid axis.
    B, H = hn_ref.shape
    t_tile = out_ref.shape[1] // H
    tid = pl.program_id(1)

    @pl.when(tid == 0)
    def _init():
        hn_ref[...] = jnp.zeros_like(hn_ref)
        cn_ref[...] = jnp.zeros_like(cn_ref)

    whh = whh_ref[...]                      # (H, 4H), grid-invariant
    wih = wih_ref[...]                      # (1, 4H)
    bias = bias_ref[...]                    # (1, 4H)
    h = hn_ref[...]                         # (B, H) carried state
    c = cn_ref[...]

    u = _pick_u(t_tile, H)
    nc = t_tile // u
    uH = u * H

    def run_chunk(xs, h, c):
        # xs: (u, B, 1). Returns the (B, u*H) output block and new state.
        outs = []
        for j in range(u):
            x_col = xs[j]                                       # (B, 1)
            gates = (x_col * wih + bias +
                     jnp.dot(h.astype(whh.dtype), whh,
                             preferred_element_type=jnp.float32))
            sig = jax.nn.sigmoid(gates[:, :3 * H])              # [i | f | o]
            g_gate = jnp.tanh(gates[:, 3 * H:])                 # g
            c = sig[:, H:2 * H] * c + sig[:, :H] * g_gate
            h = sig[:, 2 * H:3 * H] * jnp.tanh(c)
            outs.append(h)
        blk = outs[0] if u == 1 else jnp.concatenate(outs, axis=1)
        return blk, h, c

    if nc <= _MAX_STATIC_CHUNKS:
        # Static unroll; one lane-aligned store per chunk bounds live ranges.
        for ci in range(nc):
            blk, h, c = run_chunk(x_ref[pl.ds(ci * u, u), :, :], h, c)
            out_ref[:, ci * uH:(ci + 1) * uH] = blk
    else:
        # Bounded unroll: fori_loop over chunks, modest (u-step) inner unroll.
        def body(ci, carry):
            h, c = carry
            xs = x_ref[pl.ds(pl.multiple_of(ci * u, u), u), :, :]
            blk, h, c = run_chunk(xs, h, c)
            off = pl.multiple_of(ci * uH, uH)
            out_ref[:, pl.ds(off, uH)] = blk
            return (h, c)
        h, c = lax.fori_loop(0, nc, body, (h, c))

    hn_ref[...] = h
    cn_ref[...] = c


def encoder_forward(x, w_ih, w_hh, b_ih, b_hh, *, t_tile=None,
                    recurrent_matmul_dtype=jnp.float32):
    """LSTM(input_size=1, hidden_size=H, batch_first=True) forward.

    x: (B, T) float. Returns (output (B, T, H), (h_n (1, B, H), c_n (1, B, H))).
    Set recurrent_matmul_dtype=jnp.bfloat16 for faster MXU (looser numerics).
    """
    B, T = x.shape
    H = w_hh.shape[1]                                   # w_hh: (4H, H)

    def perm_gates(a, axis):
        # PyTorch gate order [i, f, g, o] -> kernel order [i, f, o, g] so
        # sigmoid covers one contiguous 3H block and tanh only H.
        i, f, g, o = jnp.split(a.astype(jnp.float32), 4, axis=axis)
        return jnp.concatenate([i, f, o, g], axis=axis)

    wih_row = perm_gates(w_ih.reshape(1, 4 * H), axis=1)          # (1, 4H)
    bias = perm_gates((b_ih + b_hh).reshape(1, 4 * H), axis=1)    # (1, 4H)
    whh_t = perm_gates(jnp.transpose(w_hh), axis=1)               # (H, 4H)
    whh_t = whh_t.astype(recurrent_matmul_dtype)

    # Time-major (T, B, 1): per-step reads index the leading dim (no dynamic
    # lane slicing) and no 4H-inflated xw precompute hits HBM.
    x_tb1 = jnp.transpose(x.astype(jnp.float32))[:, :, None]

    if t_tile is None:
        t_tile = _pick_t_tile(T, H, B)
    if T % t_tile != 0:
        raise ValueError(f"t_tile={t_tile} must divide T={T}")
    num_tiles = T // t_tile

    # Split independent sequences across the two v7x TensorCores when the
    # halves stay sublane-aligned; otherwise a single batch block.
    b_block = B // 2 if (B % 16 == 0) else B
    num_b = B // b_block

    out_flat, h_n, c_n = pl.pallas_call(
        _lstm_kernel,
        grid=(num_b, num_tiles),
        in_specs=[
            pl.BlockSpec((t_tile, b_block, 1), lambda b, t: (t, b, 0)),  # x
            pl.BlockSpec((H, 4 * H), lambda b, t: (0, 0)),               # W_hh^T
            pl.BlockSpec((1, 4 * H), lambda b, t: (0, 0)),               # W_ih row
            pl.BlockSpec((1, 4 * H), lambda b, t: (0, 0)),               # bias
        ],
        out_specs=(
            pl.BlockSpec((b_block, t_tile * H), lambda b, t: (b, t)),    # output
            pl.BlockSpec((b_block, H), lambda b, t: (b, 0)),             # h_n
            pl.BlockSpec((b_block, H), lambda b, t: (b, 0)),             # c_n
        ),
        out_shape=(
            jax.ShapeDtypeStruct((B, T * H), jnp.float32),
            jax.ShapeDtypeStruct((B, H), jnp.float32),
            jax.ShapeDtypeStruct((B, H), jnp.float32),
        ),
        compiler_params=pltpu.CompilerParams(
            dimension_semantics=("parallel", "arbitrary")),   # batch || ; T serial
    )(x_tb1, whh_t, wih_row, bias)

    output = out_flat.reshape(B, T, H)                  # free reshape, batch_first
    return output, (h_n[None, ...], c_n[None, ...])     # PyTorch (1, B, H)


def _reference_lstm(x, w_ih, w_hh, b_ih, b_hh):
    """Pure-JAX reference (PyTorch LSTM semantics) for correctness check."""
    B, T = x.shape
    H = w_hh.shape[1]
    h = jnp.zeros((B, H), jnp.float32)
    c = jnp.zeros((B, H), jnp.float32)
    outs = []
    for t in range(T):
        x_t = x[:, t:t + 1]
        gates = x_t @ w_ih.T + h @ w_hh.T + b_ih + b_hh
        i = jax.nn.sigmoid(gates[:, 0 * H:1 * H])
        f = jax.nn.sigmoid(gates[:, 1 * H:2 * H])
        g = jnp.tanh(gates[:, 2 * H:3 * H])
        o = jax.nn.sigmoid(gates[:, 3 * H:4 * H])
        c = f * c + i * g
        h = o * jnp.tanh(c)
        outs.append(h)
    return jnp.stack(outs, axis=1), h, c


if __name__ == "__main__":
    B, T, H = 2, 8, 32

    key = jax.random.PRNGKey(0)
    kx, k1, k2, k3, k4 = jax.random.split(key, 5)

    # Deterministic parameter init (PyTorch-style uniform(-1/sqrt(H), 1/sqrt(H))).
    bound = 1.0 / jnp.sqrt(jnp.float32(H))
    w_ih = jax.random.uniform(k1, (4 * H, 1), jnp.float32, -bound, bound)
    w_hh = jax.random.uniform(k2, (4 * H, H), jnp.float32, -bound, bound)
    b_ih = jax.random.uniform(k3, (4 * H,), jnp.float32, -bound, bound)
    b_hh = jax.random.uniform(k4, (4 * H,), jnp.float32, -bound, bound)

    x = jax.random.normal(kx, (B, T), jnp.float32)

    ref_out, ref_h, ref_c = _reference_lstm(x, w_ih, w_hh, b_ih, b_hh)

    # t_tile=4 -> time grid of 2 tiles (exercises the cross-tile h/c carry in
    # hn/cn); t_tile=None exercises the auto-selection path.
    for tt in (4, None):
        output, (h_n, c_n) = encoder_forward(x, w_ih, w_hh, b_ih, b_hh, t_tile=tt)
        jax.block_until_ready((output, h_n, c_n))
        assert output.shape == (B, T, H)
        assert h_n.shape == (1, B, H) and c_n.shape == (1, B, H)
        assert jnp.allclose(output, ref_out, atol=1e-5, rtol=1e-5)
        assert jnp.allclose(h_n[0], ref_h, atol=1e-5, rtol=1e-5)
        assert jnp.allclose(c_n[0], ref_c, atol=1e-5, rtol=1e-5)

    print("KERNEL_OK")
</pallas_src>

<mosaic_0001>
module attributes {stable_mosaic.version = 11 : i64} {
  func.func @_lstm_kernel(%arg0: i32, %arg1: i32, %arg2: memref<4x2x1xf32, #tpu.memory_space<vmem>>, %arg3: memref<32x128xf32, #tpu.memory_space<vmem>>, %arg4: memref<1x128xf32, #tpu.memory_space<vmem>>, %arg5: memref<1x128xf32, #tpu.memory_space<vmem>>, %arg6: memref<2x128xf32, #tpu.memory_space<vmem>>, %arg7: memref<2x32xf32, #tpu.memory_space<vmem>>, %arg8: memref<2x32xf32, #tpu.memory_space<vmem>>) attributes {dimension_semantics = [#tpu.dimension_semantics<parallel>, #tpu.dimension_semantics<arbitrary>], iteration_bounds = array<i64: 1, 2>, scalar_prefetch = 0 : i64, scratch_operands = 0 : i64, tpu.core_type = #tpu.core_type<tc>, window_params = [{transform_indices = @transform_0, window_bounds = array<i64: 4, 2, 1>}, {pipeline_mode = #tpu.pipeline_mode<synchronous>, transform_indices = @transform_1, window_bounds = array<i64: 32, 128>}, {pipeline_mode = #tpu.pipeline_mode<synchronous>, transform_indices = @transform_2, window_bounds = array<i64: 1, 128>}, {pipeline_mode = #tpu.pipeline_mode<synchronous>, transform_indices = @transform_3, window_bounds = array<i64: 1, 128>}, {transform_indices = @transform_4, window_bounds = array<i64: 2, 128>}, {transform_indices = @transform_5, window_bounds = array<i64: 2, 32>}, {transform_indices = @transform_6, window_bounds = array<i64: 2, 32>}]} {
    %c0_i32 = arith.constant 0 : i32
    %0 = arith.cmpi eq, %arg1, %c0_i32 : i32
    %1 = arith.extui %0 : i1 to i32
    %c0_i32_0 = arith.constant 0 : i32
    %2 = arith.cmpi ne, %1, %c0_i32_0 : i32
    scf.if %2 {
      %cst_26 = arith.constant 0.000000e+00 : f32
      %113 = vector.broadcast %cst_26 : f32 to vector<2x32xf32>
      %c0_27 = arith.constant 0 : index
      %c0_28 = arith.constant 0 : index
      %114 = vector.load %arg7[%c0_27, %c0_28] : memref<2x32xf32, #tpu.memory_space<vmem>>, vector<2x32xf32>
      tpu.vector_store %arg7[%c0_27, %c0_28], %113 {strides = array<i32>} : memref<2x32xf32, #tpu.memory_space<vmem>>, vector<2x32xf32>,
      %cst_29 = arith.constant 0.000000e+00 : f32
      %115 = vector.broadcast %cst_29 : f32 to vector<2x32xf32>
      %c0_30 = arith.constant 0 : index
      %c0_31 = arith.constant 0 : index
      %116 = vector.load %arg8[%c0_30, %c0_31] : memref<2x32xf32, #tpu.memory_space<vmem>>, vector<2x32xf32>
      tpu.vector_store %arg8[%c0_30, %c0_31], %115 {strides = array<i32>} : memref<2x32xf32, #tpu.memory_space<vmem>>, vector<2x32xf32>,
    } else {
    }
    %c0 = arith.constant 0 : index
    %c0_1 = arith.constant 0 : index
    %3 = vector.load %arg3[%c0, %c0_1] : memref<32x128xf32, #tpu.memory_space<vmem>>, vector<32x128xf32>
    %c0_2 = arith.constant 0 : index
    %c0_3 = arith.constant 0 : index
    %4 = vector.load %arg4[%c0_2, %c0_3] : memref<1x128xf32, #tpu.memory_space<vmem>>, vector<1x128xf32>
    %c0_4 = arith.constant 0 : index
    %c0_5 = arith.constant 0 : index
    %5 = vector.load %arg5[%c0_4, %c0_5] : memref<1x128xf32, #tpu.memory_space<vmem>>, vector<1x128xf32>
    %c0_6 = arith.constant 0 : index
    %c0_7 = arith.constant 0 : index
    %6 = vector.load %arg7[%c0_6, %c0_7] : memref<2x32xf32, #tpu.memory_space<vmem>>, vector<2x32xf32>
    %c0_8 = arith.constant 0 : index
    %c0_9 = arith.constant 0 : index
    %7 = vector.load %arg8[%c0_8, %c0_9] : memref<2x32xf32, #tpu.memory_space<vmem>>, vector<2x32xf32>
    %c0_10 = arith.constant 0 : index
    %c0_11 = arith.constant 0 : index
    %c0_12 = arith.constant 0 : index
    %8 = vector.load %arg2[%c0_10, %c0_11, %c0_12] : memref<4x2x1xf32, #tpu.memory_space<vmem>>, vector<4x2x1xf32>
    %9 = vector.extract_strided_slice %8 {offsets = [0, 0, 0], sizes = [1, 2, 1], strides = [1, 1, 1]} : vector<4x2x1xf32> to vector<1x2x1xf32>
    %10 = vector.shape_cast %9 : vector<1x2x1xf32> to vector<2x1xf32>
    %11 = vector.broadcast %10 : vector<2x1xf32> to vector<2x128xf32>
    %12 = vector.broadcast %4 : vector<1x128xf32> to vector<2x128xf32>
    %13 = arith.mulf %11, %12 : vector<2x128xf32>
    %14 = vector.broadcast %5 : vector<1x128xf32> to vector<2x128xf32>
    %15 = arith.addf %13, %14 : vector<2x128xf32>
    %cst = arith.constant dense<0.000000e+00> : vector<2x128xf32>
    %16 = tpu.matmul %6, %3, %cst {dimension_numbers = #tpu.dot_dimension_numbers<[1], [0], [0], [1], [0, 0, 1, 1], [], []>} : vector<2x32xf32>, vector<32x128xf32>, vector<2x128xf32> -> vector<2x128xf32>
    %17 = arith.addf %15, %16 : vector<2x128xf32>
    %18 = vector.extract_strided_slice %17 {offsets = [0, 0], sizes = [2, 96], strides = [1, 1]} : vector<2x128xf32> to vector<2x96xf32>
    %19 = arith.negf %18 : vector<2x96xf32>
    %20 = math.exp %19 : vector<2x96xf32>
    %cst_13 = arith.constant 1.000000e+00 : f32
    %21 = vector.broadcast %cst_13 : f32 to vector<2x96xf32>
    %22 = arith.addf %21, %20 : vector<2x96xf32>
    %23 = arith.divf %21, %22 : vector<2x96xf32>
    %24 = vector.extract_strided_slice %17 {offsets = [0, 96], sizes = [2, 32], strides = [1, 1]} : vector<2x128xf32> to vector<2x32xf32>
    %25 = math.tanh %24 : vector<2x32xf32>
    %26 = vector.extract_strided_slice %23 {offsets = [0, 32], sizes = [2, 32], strides = [1, 1]} : vector<2x96xf32> to vector<2x32xf32>
    %27 = arith.mulf %26, %7 : vector<2x32xf32>
    %28 = vector.extract_strided_slice %23 {offsets = [0, 0], sizes = [2, 32], strides = [1, 1]} : vector<2x96xf32> to vector<2x32xf32>
    %29 = arith.mulf %28, %25 : vector<2x32xf32>
    %30 = arith.addf %27, %29 : vector<2x32xf32>
    %31 = vector.extract_strided_slice %23 {offsets = [0, 64], sizes = [2, 32], strides = [1, 1]} : vector<2x96xf32> to vector<2x32xf32>
    %32 = math.tanh %30 : vector<2x32xf32>
    %33 = arith.mulf %31, %32 : vector<2x32xf32>
    %34 = vector.extract_strided_slice %8 {offsets = [1, 0, 0], sizes = [1, 2, 1], strides = [1, 1, 1]} : vector<4x2x1xf32> to vector<1x2x1xf32>
    %35 = vector.shape_cast %34 : vector<1x2x1xf32> to vector<2x1xf32>
    %36 = vector.broadcast %35 : vector<2x1xf32> to vector<2x128xf32>
    %37 = vector.broadcast %4 : vector<1x128xf32> to vector<2x128xf32>
    %38 = arith.mulf %36, %37 : vector<2x128xf32>
    %39 = vector.broadcast %5 : vector<1x128xf32> to vector<2x128xf32>
    %40 = arith.addf %38, %39 : vector<2x128xf32>
    %cst_14 = arith.constant dense<0.000000e+00> : vector<2x128xf32>
    %41 = tpu.matmul %33, %3, %cst_14 {dimension_numbers = #tpu.dot_dimension_numbers<[1], [0], [0], [1], [0, 0, 1, 1], [], []>} : vector<2x32xf32>, vector<32x128xf32>, vector<2x128xf32> -> vector<2x128xf32>
    %42 = arith.addf %40, %41 : vector<2x128xf32>
    %43 = vector.extract_strided_slice %42 {offsets = [0, 0], sizes = [2, 96], strides = [1, 1]} : vector<2x128xf32> to vector<2x96xf32>
    %44 = arith.negf %43 : vector<2x96xf32>
    %45 = math.exp %44 : vector<2x96xf32>
    %cst_15 = arith.constant 1.000000e+00 : f32
    %46 = vector.broadcast %cst_15 : f32 to vector<2x96xf32>
    %47 = arith.addf %46, %45 : vector<2x96xf32>
    %48 = arith.divf %46, %47 : vector<2x96xf32>
    %49 = vector.extract_strided_slice %42 {offsets = [0, 96], sizes = [2, 32], strides = [1, 1]} : vector<2x128xf32> to vector<2x32xf32>
    %50 = math.tanh %49 : vector<2x32xf32>
    %51 = vector.extract_strided_slice %48 {offsets = [0, 32], sizes = [2, 32], strides = [1, 1]} : vector<2x96xf32> to vector<2x32xf32>
    %52 = arith.mulf %51, %30 : vector<2x32xf32>
    %53 = vector.extract_strided_slice %48 {offsets = [0, 0], sizes = [2, 32], strides = [1, 1]} : vector<2x96xf32> to vector<2x32xf32>
    %54 = arith.mulf %53, %50 : vector<2x32xf32>
    %55 = arith.addf %52, %54 : vector<2x32xf32>
    %56 = vector.extract_strided_slice %48 {offsets = [0, 64], sizes = [2, 32], strides = [1, 1]} : vector<2x96xf32> to vector<2x32xf32>
    %57 = math.tanh %55 : vector<2x32xf32>
    %58 = arith.mulf %56, %57 : vector<2x32xf32>
    %59 = vector.extract_strided_slice %8 {offsets = [2, 0, 0], sizes = [1, 2, 1], strides = [1, 1, 1]} : vector<4x2x1xf32> to vector<1x2x1xf32>
    %60 = vector.shape_cast %59 : vector<1x2x1xf32> to vector<2x1xf32>
    %61 = vector.broadcast %60 : vector<2x1xf32> to vector<2x128xf32>
    %62 = vector.broadcast %4 : vector<1x128xf32> to vector<2x128xf32>
    %63 = arith.mulf %61, %62 : vector<2x128xf32>
    %64 = vector.broadcast %5 : vector<1x128xf32> to vector<2x128xf32>
    %65 = arith.addf %63, %64 : vector<2x128xf32>
    %cst_16 = arith.constant dense<0.000000e+00> : vector<2x128xf32>
    %66 = tpu.matmul %58, %3, %cst_16 {dimension_numbers = #tpu.dot_dimension_numbers<[1], [0], [0], [1], [0, 0, 1, 1], [], []>} : vector<2x32xf32>, vector<32x128xf32>, vector<2x128xf32> -> vector<2x128xf32>
    %67 = arith.addf %65, %66 : vector<2x128xf32>
    %68 = vector.extract_strided_slice %67 {offsets = [0, 0], sizes = [2, 96], strides = [1, 1]} : vector<2x128xf32> to vector<2x96xf32>
    %69 = arith.negf %68 : vector<2x96xf32>
    %70 = math.exp %69 : vector<2x96xf32>
    %cst_17 = arith.constant 1.000000e+00 : f32
    %71 = vector.broadcast %cst_17 : f32 to vector<2x96xf32>
    %72 = arith.addf %71, %70 : vector<2x96xf32>
    %73 = arith.divf %71, %72 : vector<2x96xf32>
    %74 = vector.extract_strided_slice %67 {offsets = [0, 96], sizes = [2, 32], strides = [1, 1]} : vector<2x128xf32> to vector<2x32xf32>
    %75 = math.tanh %74 : vector<2x32xf32>
    %76 = vector.extract_strided_slice %73 {offsets = [0, 32], sizes = [2, 32], strides = [1, 1]} : vector<2x96xf32> to vector<2x32xf32>
    %77 = arith.mulf %76, %55 : vector<2x32xf32>
    %78 = vector.extract_strided_slice %73 {offsets = [0, 0], sizes = [2, 32], strides = [1, 1]} : vector<2x96xf32> to vector<2x32xf32>
    %79 = arith.mulf %78, %75 : vector<2x32xf32>
    %80 = arith.addf %77, %79 : vector<2x32xf32>
    %81 = vector.extract_strided_slice %73 {offsets = [0, 64], sizes = [2, 32], strides = [1, 1]} : vector<2x96xf32> to vector<2x32xf32>
    %82 = math.tanh %80 : vector<2x32xf32>
    %83 = arith.mulf %81, %82 : vector<2x32xf32>
    %84 = vector.extract_strided_slice %8 {offsets = [3, 0, 0], sizes = [1, 2, 1], strides = [1, 1, 1]} : vector<4x2x1xf32> to vector<1x2x1xf32>
    %85 = vector.shape_cast %84 : vector<1x2x1xf32> to vector<2x1xf32>
    %86 = vector.broadcast %85 : vector<2x1xf32> to vector<2x128xf32>
    %87 = vector.broadcast %4 : vector<1x128xf32> to vector<2x128xf32>
    %88 = arith.mulf %86, %87 : vector<2x128xf32>
    %89 = vector.broadcast %5 : vector<1x128xf32> to vector<2x128xf32>
    %90 = arith.addf %88, %89 : vector<2x128xf32>
    %cst_18 = arith.constant dense<0.000000e+00> : vector<2x128xf32>
    %91 = tpu.matmul %83, %3, %cst_18 {dimension_numbers = #tpu.dot_dimension_numbers<[1], [0], [0], [1], [0, 0, 1, 1], [], []>} : vector<2x32xf32>, vector<32x128xf32>, vector<2x128xf32> -> vector<2x128xf32>
    %92 = arith.addf %90, %91 : vector<2x128xf32>
    %93 = vector.extract_strided_slice %92 {offsets = [0, 0], sizes = [2, 96], strides = [1, 1]} : vector<2x128xf32> to vector<2x96xf32>
    %94 = arith.negf %93 : vector<2x96xf32>
    %95 = math.exp %94 : vector<2x96xf32>
    %cst_19 = arith.constant 1.000000e+00 : f32
    %96 = vector.broadcast %cst_19 : f32 to vector<2x96xf32>
    %97 = arith.addf %96, %95 : vector<2x96xf32>
    %98 = arith.divf %96, %97 : vector<2x96xf32>
    %99 = vector.extract_strided_slice %92 {offsets = [0, 96], sizes = [2, 32], strides = [1, 1]} : vector<2x128xf32> to vector<2x32xf32>
    %100 = math.tanh %99 : vector<2x32xf32>
    %101 = vector.extract_strided_slice %98 {offsets = [0, 32], sizes = [2, 32], strides = [1, 1]} : vector<2x96xf32> to vector<2x32xf32>
    %102 = arith.mulf %101, %80 : vector<2x32xf32>
    %103 = vector.extract_strided_slice %98 {offsets = [0, 0], sizes = [2, 32], strides = [1, 1]} : vector<2x96xf32> to vector<2x32xf32>
    %104 = arith.mulf %103, %100 : vector<2x32xf32>
    %105 = arith.addf %102, %104 : vector<2x32xf32>
    %106 = vector.extract_strided_slice %98 {offsets = [0, 64], sizes = [2, 32], strides = [1, 1]} : vector<2x96xf32> to vector<2x32xf32>
    %107 = math.tanh %105 : vector<2x32xf32>
    %108 = arith.mulf %106, %107 : vector<2x32xf32>
    %109 = tpu.concatenate %33, %58, %83, %108 in 1 : vector<2x32xf32>, vector<2x32xf32>, vector<2x32xf32>, vector<2x32xf32> -> vector<2x128xf32>
    %c0_20 = arith.constant 0 : index
    %c0_21 = arith.constant 0 : index
    %110 = vector.load %arg6[%c0_20, %c0_21] : memref<2x128xf32, #tpu.memory_space<vmem>>, vector<2x128xf32>
    tpu.vector_store %arg6[%c0_20, %c0_21], %109 {strides = array<i32>} : memref<2x128xf32, #tpu.memory_space<vmem>>, vector<2x128xf32>,
    %c0_22 = arith.constant 0 : index
    %c0_23 = arith.constant 0 : index
    %111 = vector.load %arg7[%c0_22, %c0_23] : memref<2x32xf32, #tpu.memory_space<vmem>>, vector<2x32xf32>
    tpu.vector_store %arg7[%c0_22, %c0_23], %108 {strides = array<i32>} : memref<2x32xf32, #tpu.memory_space<vmem>>, vector<2x32xf32>,
    %c0_24 = arith.constant 0 : index
    %c0_25 = arith.constant 0 : index
    %112 = vector.load %arg8[%c0_24, %c0_25] : memref<2x32xf32, #tpu.memory_space<vmem>>, vector<2x32xf32>
    tpu.vector_store %arg8[%c0_24, %c0_25], %105 {strides = array<i32>} : memref<2x32xf32, #tpu.memory_space<vmem>>, vector<2x32xf32>,
    return
  }
  func.func @transform_0(%arg0: i32, %arg1: i32) -> (i32, i32, i32) {
    %c0_i32 = arith.constant 0 : i32
    %c0_i32_0 = arith.constant 0 : i32
    return %arg1, %arg0, %c0_i32 : i32, i32, i32
  }
  func.func @transform_1(%arg0: i32, %arg1: i32) -> (i32, i32) {
    %c0_i32 = arith.constant 0 : i32
    %c0_i32_0 = arith.constant 0 : i32
    %c0_i32_1 = arith.constant 0 : i32
    return %c0_i32, %c0_i32_0 : i32, i32
  }
  func.func @transform_2(%arg0: i32, %arg1: i32) -> (i32, i32) {
    %c0_i32 = arith.constant 0 : i32
    %c0_i32_0 = arith.constant 0 : i32
    %c0_i32_1 = arith.constant 0 : i32
    return %c0_i32, %c0_i32_0 : i32, i32
  }
  func.func @transform_3(%arg0: i32, %arg1: i32) -> (i32, i32) {
    %c0_i32 = arith.constant 0 : i32
    %c0_i32_0 = arith.constant 0 : i32
    %c0_i32_1 = arith.constant 0 : i32
    return %c0_i32, %c0_i32_0 : i32, i32
  }
  func.func @transform_4(%arg0: i32, %arg1: i32) -> (i32, i32) {
    %c0_i32 = arith.constant 0 : i32
    return %arg0, %arg1 : i32, i32
  }
  func.func @transform_5(%arg0: i32, %arg1: i32) -> (i32, i32) {
    %c0_i32 = arith.constant 0 : i32
    %c0_i32_0 = arith.constant 0 : i32
    return %arg0, %c0_i32 : i32, i32
  }
  func.func @transform_6(%arg0: i32, %arg1: i32) -> (i32, i32) {
    %c0_i32 = arith.constant 0 : i32
    %c0_i32_0 = arith.constant 0 : i32
    return %arg0, %c0_i32 : i32, i32
  }
}

</mosaic_0001>

<llo_original>
// kernel: tpu_custom_call.1
$region0: #{tpu_custom_call.1}
  #allocation0 [shape = 'u32[]', space=smem, size = 0x4, offset = 0x4, fixed_abs, tag = 'smem constant byte address 0x4 - core index']
  #allocation1 [shape = 'u32[144,128]{1,0:T(1,128)}', space=vmem, size = 0x12000, scoped, tag = 'internal scratch']
  %s0 = inlined_call_operand.vmem [shape: f32[8,2,1], index: 0, kind: input, shape index: {}]
  %s1 = inlined_call_operand.hbm [shape: f32[32,128], index: 1, kind: input, shape index: {}]
  %s2 = inlined_call_operand.vmem [shape: f32[1,128], index: 2, kind: input, shape index: {}]
  %s3 = inlined_call_operand.vmem [shape: f32[1,128], index: 3, kind: input, shape index: {}]
  %s4 = inlined_call_operand.hbm [shape: f32[2,256], index: 4, kind: output, shape index: {0}]
  %s5 = inlined_call_operand.hbm [shape: f32[2,32], index: 5, kind: output, shape index: {1}]
  %s6 = inlined_call_operand.hbm [shape: f32[2,32], index: 6, kind: output, shape index: {2}]
  %7 = xla_tuple %s4, %s5, %s6
  %s8 = sld [smem:[#allocation0]]
  $region73: #{tpu_custom_call.1} parent=0
    _
  %s10 = ssub.s32 1, %s8
  %s11 = scalar_select 0, %s10, %s8
  $region1: #{tpu_custom_call.1} parent=0
    #allocation2 [shape = 'u8[16384]{0}', space=vmem, size = 0x4000, scoped, tag = 'input window, operand 1, single buffered']
    #allocation3 [shape = 's32[2]{0}', space=sflag, size = 0x8, scoped, tag = 'scoped memory for tpu_custom_call.1']
    #allocation4 [shape = 's32[2]{0}', space=sflag, size = 0x8, scoped, tag = 'scoped memory for tpu_custom_call.1']
    #allocation5 [shape = 'u8[2048]{0}', space=vmem, size = 0x800, scoped, tag = 'output window, operand 0']
    #allocation6 [shape = 'u8[1024]{0}', space=vmem, size = 0x400, scoped, tag = 'output window, operand 1, single buffered']
    #allocation7 [shape = 's32[1]{0}', space=sflag, size = 0x4, scoped, tag = 'scoped memory for tpu_custom_call.1']
    #allocation8 [shape = 'u8[1024]{0}', space=vmem, size = 0x400, scoped, tag = 'output window, operand 2, single buffered']
    %12 = vsyncpa [#allocation3], 0
    %13 = vsyncpa [#allocation4], 0
    %s14 = scalar_lea.sflag [#allocation4], 1
    %15 = vsyncpa %s14, 0
    %16 = vsyncpa [#allocation7], 0
    loop: start=0, step=1, limit=4
    $region2: #{tpu_custom_call.1} parent=1 // loop_pre_header
      _
    $region3: #{tpu_custom_call.1} parent=1 // loop_header
      %s18 = sphi 0, %s22
      %p19 = scmp.ge.s32.totalorder %s18, 4
      %s25 = sphi 0, %s37
      %s26 = sphi 0, %s33
      %s27 = sphi 0, %s25
      %s28 = sphi 0, %s26
      %s29 = sphi 0, %s27
      %s30 = sphi 0, %s28
      %s42 = sphi 0, %s44
      %s45 = sphi 0, %s42
      %s46 = sphi 0, %s45
      %s62 = sphi 0, %s46
      %s66 = sphi 0, %s66
      %s68 = sphi 0, %s66
      %s69 = sphi 0, %s68
      %s83 = sphi 0, %s69
      %s87 = sphi 0, %s87
      %s89 = sphi 0, %s87
      %s90 = sphi 0, %s89
      %s104 = sphi 0, %s90
      %s108 = sphi 0, %s108
      %s110 = sphi 0, %s108
      %s111 = sphi 0, %s110
      %s125 = sphi 0, %s111
      %s133 = sphi 0, %s135
      %s136 = sphi 0, %s133
      %s137 = sphi 0, %s136
      %s153 = sphi 0, %s137
      %s159 = sphi 0, %s161
      %s162 = sphi 0, %s159
      %s163 = sphi 0, %s162
      %s179 = sphi 0, %s163
      %s185 = sphi 0, %s187
      %s188 = sphi 0, %s185
      %s189 = sphi 0, %s188
      %s205 = sphi 0, %s189
    $region4: #{tpu_custom_call.1} parent=1 // loop_header_branch
      %21 = sbr.rel (%p19) target = $region8
    $region5: #{tpu_custom_call.1} parent=1 // loop_body
      %s23 = ssub.s32 %s18, 1
      %s24 = ssub.s32 %s18, 2
      %s31 = sadd.s32 1, %s26
      %p32 = scmp.ge.s32.totalorder %s31, 2
      %s33 = scalar_select %p32, 0, %s31
      %s34 = sadd.s32 1, %s25
      %s35 = scalar_select %p32, %s34, %s25
      %p36 = scmp.ge.s32.totalorder %s35, 1
      %s37 = scalar_select %p36, 0, %s35
      %s38 = ssub.s32 %s26, %s33
      %s39 = ssub.s32 %s25, %s37
      %s40 = sor.u32 %s38, %s39
      %p41 = scmp.eq.s32.totalorder %s40, 0
      %s43 = sadd.s32 %s42, 1
      %s44 = scalar_select %p41, %s42, %s43
      %p47 = pneg %p41
      %p48 = scmp.eq.s32.totalorder %s18, 1
      %p49 = por %p47, %p48
      %p50 = scmp.ne.s32.totalorder %s42, %s45
      %p51 = scmp.eq.s32.totalorder %s18, 0
      %p52 = por %p50, %p51
      %p53 = scmp.ne.s32.totalorder %s42, %s45
      %p54 = scmp.eq.s32.totalorder %s23, 1
      %p55 = por %p53, %p54
      %p56 = scmp.ne.s32.totalorder %s45, %s46
      %p57 = scmp.eq.s32.totalorder %s23, 0
      %p58 = por %p56, %p57
      %p59 = scmp.ne.s32.totalorder %s45, %s46
      %p60 = scmp.eq.s32.totalorder %s24, 1
      %p61 = por %p59, %p60
      %p63 = scmp.ne.s32.totalorder %s46, %s62
      %p64 = scmp.eq.s32.totalorder %s24, 0
      %p65 = por %p63, %p64
      %s67 = sadd.s32 %s66, 1
      %p70 = scmp.eq.s32.totalorder %s18, 1
      %p71 = scmp.ne.s32.totalorder %s66, %s68
      %p72 = scmp.eq.s32.totalorder %s18, 0
      %p73 = por %p71, %p72
      %p74 = scmp.ne.s32.totalorder %s66, %s68
      %p75 = scmp.eq.s32.totalorder %s23, 1
      %p76 = por %p74, %p75
      %p77 = scmp.ne.s32.totalorder %s68, %s69
      %p78 = scmp.eq.s32.totalorder %s23, 0
      %p79 = por %p77, %p78
      %p80 = scmp.ne.s32.totalorder %s68, %s69
      %p81 = scmp.eq.s32.totalorder %s24, 1
      %p82 = por %p80, %p81
      %p84 = scmp.ne.s32.totalorder %s69, %s83
      %p85 = scmp.eq.s32.totalorder %s24, 0
      %p86 = por %p84, %p85
      %s88 = sadd.s32 %s87, 1
      %p91 = scmp.eq.s32.totalorder %s18, 1
      %p92 = scmp.ne.s32.totalorder %s87, %s89
      %p93 = scmp.eq.s32.totalorder %s18, 0
      %p94 = por %p92, %p93
      %p95 = scmp.ne.s32.totalorder %s87, %s89
      %p96 = scmp.eq.s32.totalorder %s23, 1
      %p97 = por %p95, %p96
      %p98 = scmp.ne.s32.totalorder %s89, %s90
      %p99 = scmp.eq.s32.totalorder %s23, 0
      %p100 = por %p98, %p99
      %p101 = scmp.ne.s32.totalorder %s89, %s90
      %p102 = scmp.eq.s32.totalorder %s24, 1
      %p103 = por %p101, %p102
      %p105 = scmp.ne.s32.totalorder %s90, %s104
      %p106 = scmp.eq.s32.totalorder %s24, 0
      %p107 = por %p105, %p106
      %s109 = sadd.s32 %s108, 1
      %p112 = scmp.eq.s32.totalorder %s18, 1
      %p113 = scmp.ne.s32.totalorder %s108, %s110
      %p114 = scmp.eq.s32.totalorder %s18, 0
      %p115 = por %p113, %p114
      %p116 = scmp.ne.s32.totalorder %s108, %s110
      %p117 = scmp.eq.s32.totalorder %s23, 1
      %p118 = por %p116, %p117
      %p119 = scmp.ne.s32.totalorder %s110, %s111
      %p120 = scmp.eq.s32.totalorder %s23, 0
      %p121 = por %p119, %p120
      %p122 = scmp.ne.s32.totalorder %s110, %s111
      %p123 = scmp.eq.s32.totalorder %s24, 1
      %p124 = por %p122, %p123
      %p126 = scmp.ne.s32.totalorder %s111, %s125
      %p127 = scmp.eq.s32.totalorder %s24, 0
      %p128 = por %p126, %p127
      %s129 = ssub.s32 %s25, %s37
      %s130 = ssub.s32 %s26, %s33
      %s131 = sor.u32 %s129, %s130
      %p132 = scmp.eq.s32.totalorder %s131, 0
      %s134 = sadd.s32 %s133, 1
      %s135 = scalar_select %p132, %s133, %s134
      %p138 = pneg %p132
      %p139 = scmp.eq.s32.totalorder %s18, 1
      %p140 = por %p138, %p139
      %p141 = scmp.ne.s32.totalorder %s133, %s136
      %p142 = scmp.eq.s32.totalorder %s18, 0
      %p143 = por %p141, %p142
      %p144 = scmp.ne.s32.totalorder %s133, %s136
      %p145 = scmp.eq.s32.totalorder %s23, 1
      %p146 = por %p144, %p145
      %p147 = scmp.ne.s32.totalorder %s136, %s137
      %p148 = scmp.eq.s32.totalorder %s23, 0
      %p149 = por %p147, %p148
      %p150 = scmp.ne.s32.totalorder %s136, %s137
      %p151 = scmp.eq.s32.totalorder %s24, 1
      %p152 = por %p150, %p151
      %p154 = scmp.ne.s32.totalorder %s137, %s153
      %p155 = scmp.eq.s32.totalorder %s24, 0
      %p156 = por %p154, %p155
      %s157 = ssub.s32 %s25, %s37
      %p158 = scmp.eq.s32.totalorder %s157, 0
      %s160 = sadd.s32 %s159, 1
      %s161 = scalar_select %p158, %s159, %s160
      %p164 = pneg %p158
      %p165 = scmp.eq.s32.totalorder %s18, 1
      %p166 = por %p164, %p165
      %p167 = scmp.ne.s32.totalorder %s159, %s162
      %p168 = scmp.eq.s32.totalorder %s18, 0
      %p169 = por %p167, %p168
      %p170 = scmp.ne.s32.totalorder %s159, %s162
      %p171 = scmp.eq.s32.totalorder %s23, 1
      %p172 = por %p170, %p171
      %p173 = scmp.ne.s32.totalorder %s162, %s163
      %p174 = scmp.eq.s32.totalorder %s23, 0
      %p175 = por %p173, %p174
      %p176 = scmp.ne.s32.totalorder %s162, %s163
      %p177 = scmp.eq.s32.totalorder %s24, 1
      %p178 = por %p176, %p177
      %p180 = scmp.ne.s32.totalorder %s163, %s179
      %p181 = scmp.eq.s32.totalorder %s24, 0
      %p182 = por %p180, %p181
      %s183 = ssub.s32 %s25, %s37
      %p184 = scmp.eq.s32.totalorder %s183, 0
      %s186 = sadd.s32 %s185, 1
      %s187 = scalar_select %p184, %s185, %s186
      %p190 = pneg %p184
      %p191 = scmp.eq.s32.totalorder %s18, 1
      %p192 = por %p190, %p191
      %p193 = scmp.ne.s32.totalorder %s185, %s188
      %p194 = scmp.eq.s32.totalorder %s18, 0
      %p195 = por %p193, %p194
      %p196 = scmp.ne.s32.totalorder %s185, %s188
      %p197 = scmp.eq.s32.totalorder %s23, 1
      %p198 = por %p196, %p197
      %p199 = scmp.ne.s32.totalorder %s188, %s189
      %p200 = scmp.eq.s32.totalorder %s23, 0
      %p201 = por %p199, %p200
      %p202 = scmp.ne.s32.totalorder %s188, %s189
      %p203 = scmp.eq.s32.totalorder %s24, 1
      %p204 = por %p202, %p203
      %p206 = scmp.ne.s32.totalorder %s189, %s205
      %p207 = scmp.eq.s32.totalorder %s24, 0
      %p208 = por %p206, %p207
      %p209 = scmp.le.s32.totalorder 1, %s18
      %p210 = scmp.lt.s32.totalorder %s18, 3
      %p211 = pnand %p209, %p210
      %p212 = pneg %p211
      // Predicated region
      $region9: #{tpu_custom_call.1} parent=5 // pred_check
        _
      $region10: #{tpu_custom_call.1} parent=5 // pred_check_branch
        %214 = sbr.rel (%p211) target = $region12
      $region11: #{tpu_custom_call.1} parent=5 // pred_region
        %s215 = ssub.s32 %s18, 1
        // Predicated region
        $region13: #{tpu_custom_call.1} parent=11 // pred_check
          %p216 = pneg %p79
        $region14: #{tpu_custom_call.1} parent=11 // pred_check_branch
          %218 = sbr.rel (%p216) target = $region16
        $region15: #{tpu_custom_call.1} parent=11 // pred_region
          %s220 = ssub.s32 512, 512
          %221 = vsyncadd [#allocation3], %s220
          %s222 = sshll.u32 [#allocation2], 4
          %s223 = int_to_ptr.vmem [resolvable:$true] %s222
          %228 = dma.hbm_to_vmem [thread:$0]  %s1, 512, %s223, [#allocation3], 128, 128, 8
        $region16: #{tpu_custom_call.1} parent=11 // pred_fallthru
          _
        // Predicated region
        $region17: #{tpu_custom_call.1} parent=11 // pred_check
          %p229 = pneg %p100
        $region18: #{tpu_custom_call.1} parent=11 // pred_check_branch
          %231 = sbr.rel (%p229) target = $region20
        $region19: #{tpu_custom_call.1} parent=11 // pred_region
          _
        $region20: #{tpu_custom_call.1} parent=11 // pred_fallthru
          _
        // Predicated region
        $region21: #{tpu_custom_call.1} parent=11 // pred_check
          %p232 = pneg %p121
        $region22: #{tpu_custom_call.1} parent=11 // pred_check_branch
          %234 = sbr.rel (%p232) target = $region24
        $region23: #{tpu_custom_call.1} parent=11 // pred_region
          _
        $region24: #{tpu_custom_call.1} parent=11 // pred_fallthru
          _
      $region12: #{tpu_custom_call.1} parent=5 // pred_fallthru
        _
      %p235 = scmp.lt.s32.totalorder %s18, 2
      // Predicated region
      $region25: #{tpu_custom_call.1} parent=5 // pred_check
        %p236 = pneg %p235
      $region26: #{tpu_custom_call.1} parent=5 // pred_check_branch
        %238 = sbr.rel (%p236) target = $region28
      $region27: #{tpu_custom_call.1} parent=5 // pred_region
        // Predicated region
        $region29: #{tpu_custom_call.1} parent=27 // pred_check
          %p239 = pneg %p52
        $region30: #{tpu_custom_call.1} parent=27 // pred_check_branch
          %241 = sbr.rel (%p239) target = $region32
        $region31: #{tpu_custom_call.1} parent=27 // pred_region
          %s242 = smul.u32 4, %s26
          %p243 = scmp.lt.s32.totalorder %s242, 7
          %s244 = scalar_select %p243, %s242, 7
          %p245 = scmp.lt.s32.totalorder %s25, 0
          %s246 = scalar_select %p245, %s25, 0
          %s247 = sadd.s32 %s246, %s244
          %s248 = smul.addr %s247, 2
          %s249 = scalar_lea.vmem %s0, %s248
          %s250 = smul.u32 4, %s26
        $region32: #{tpu_custom_call.1} parent=27 // pred_fallthru
          _
      $region28: #{tpu_custom_call.1} parent=5 // pred_fallthru
        _
      %p251 = scmp.le.s32.totalorder 1, %s18
      %p252 = scmp.lt.s32.totalorder %s18, 3
      %p253 = pnand %p251, %p252
      %p254 = pneg %p253
      // Predicated region
      $region33: #{tpu_custom_call.1} parent=5 // pred_check
        _
      $region34: #{tpu_custom_call.1} parent=5 // pred_check_branch
        %256 = sbr.rel (%p253) target = $region36
      $region35: #{tpu_custom_call.1} parent=5 // pred_region
        %s257 = ssub.s32 %s18, 1
        // Predicated region
        $region37: #{tpu_custom_call.1} parent=35 // pred_check
          %p258 = pneg %p79
        $region38: #{tpu_custom_call.1} parent=35 // pred_check_branch
          %260 = sbr.rel (%p258) target = $region40
        $region39: #{tpu_custom_call.1} parent=35 // pred_region
          %261 = dma.done [#allocation3], 512
        $region40: #{tpu_custom_call.1} parent=35 // pred_fallthru
          _
        %s262 = smul.u32 4, %s28
        %p263 = scmp.lt.s32.totalorder %s262, 7
        %s264 = scalar_select %p263, %s262, 7
        %p265 = scmp.lt.s32.totalorder %s27, 0
        %s266 = scalar_select %p265, %s27, 0
        %s267 = sadd.s32 %s266, %s264
        %s268 = smul.addr %s267, 2
        %s269 = scalar_lea.vmem %s0, %s268
        %p270 = pneg %p58
        %p271 = pneg %p55
        %p272 = pneg %p79
        %p273 = pneg %p76
        %p274 = pneg %p100
        %p275 = pneg %p97
        %p276 = pneg %p121
        %p277 = pneg %p118
        %p278 = pneg %p149
        %p279 = pneg %p146
        %s280 = sand.u32 %s136, 1
        %s281 = scalar_lea.sflag [#allocation4], %s280
        %s282 = sand.u32 %s136, 1
        %s283 = smul.addr %s282, 2
        %s284 = scalar_lea.vmem [#allocation5], %s283
        %p285 = pneg %p175
        %p286 = pneg %p172
        %p287 = pneg %p201
        %p288 = pneg %p198
        %s289 = smul.u32 4, %s28
        %p290 = scmp.lt.s32.totalorder %s289, 7
        %s291 = scalar_select %p290, %s289, 7
        %p292 = scmp.lt.s32.totalorder %s27, 0
        %s293 = scalar_select %p292, %s27, 0
        %s294 = sadd.s32 %s293, %s291
        %s295 = smul.addr %s294, 2
        %s296 = scalar_lea.vmem %s0, %s295
        %s297 = smul.u32 4, %s28
        %p298 = scmp.eq.s32.totalorder %s28, 0
        // Predicated region
        $region41: #{tpu_custom_call.1} parent=35 // pred_check
          %p299 = pneg %p298
        $region42: #{tpu_custom_call.1} parent=35 // pred_check_branch
          %301 = sbr.rel (%p299) target = $region44
        $region43: #{tpu_custom_call.1} parent=35 // pred_region
          %vm302 = vcmask 254976
          %303 = vst.msk [vmem:[#allocation6] sm:$0x3] %vm302, 0.0
          %304 = vst.msk [vmem:[#allocation8] sm:$0x3] %vm302, 0.0
        $region44: #{tpu_custom_call.1} parent=35 // pred_fallthru
          _
        %v305 = vld [vmem:[#allocation2] sm:$0xff]
        %v306 = vld [vmem:[#allocation2 + $0x8] sm:$0xff]
        %v307 = vld [vmem:[#allocation2 + $0x10] sm:$0xff]
        %v308 = vld [vmem:[#allocation2 + $0x18] sm:$0xff]
        %v309 = vld [vmem:[%s2] sm:$0x1]
        %v310 = vld [vmem:[%s3] sm:$0x1]
        %v311 = vld [vmem:[#allocation6] sm:$0x3]
        %v312 = vld [vmem:[#allocation8] sm:$0x3]
        %v313 = vld [vmem:[%s296] sm:$0x3]
        %v314 = vld [vmem:[%s296 + $0x2] sm:$0x3]
        %v315 = vld [vmem:[%s296 + $0x4] sm:$0x3]
        %v316 = vld [vmem:[%s296 + $0x6] sm:$0x3]
        %318 = vset.pattern.permute.xlu0 0
        %319 = vperm.xlu0 %318, %v313
        %v320 = vpop.permute.xlu0 %319
        %v323 = vlaneseq
        %v324 = vshrl.u32 %v323, 7
        %v325 = vsub.s32 0, %v324
        %v326 = vrot.slane %v309, %v325
        %v328 = vmul.f32 %v320, %v326
        %v330 = vlaneseq
        %v331 = vshrl.u32 %v330, 7
        %v332 = vsub.s32 0, %v331
        %v333 = vrot.slane %v310, %v332
        %v335 = vadd.f32 %v328, %v333
        %vm336 = vcmask 261120
        %v338 = vsel %vm336, %v311, 0
        %340 = vmatprep.subr.mxu0 0.0
        %341 = vmatpush1.msra.mxu0 %v305
        %342 = vmatprep.subr.mxu0 0.0
        %343 = vmatpush1.msra.mxu0 %v306
        %344 = vmatprep.subr.mxu0 0.0
        %345 = vmatpush1.msra.mxu0 %v307
        %346 = vmatprep.subr.mxu0 0.0
        %347 = vmatpush1.msra.mxu0 %v308
        %348 = vmatprep.subr.mxu0 0.0
        %349 = vmatpush1.msra.mxu0 0.0
        %350 = vmatprep.subr.mxu0 0.0
        %351 = vmatpush1.msra.mxu0 0.0
        %352 = vmatprep.subr.mxu0 0.0
        %353 = vmatpush1.msra.mxu0 0.0
        %354 = vmatprep.subr.mxu0 0.0
        %355 = vmatpush1.msra.mxu0 0.0
        %356 = vmatprep.subr.mxu0 0.0
        %357 = vmatpush1.msra.mxu0 0.0
        %358 = vmatprep.subr.mxu0 0.0
        %359 = vmatpush1.msra.mxu0 0.0
        %360 = vmatprep.subr.mxu0 0.0
        %361 = vmatpush1.msra.mxu0 0.0
        %362 = vmatprep.subr.mxu0 0.0
        %363 = vmatpush1.msra.mxu0 0.0
        %364 = vmatprep.subr.mxu0 0.0
        %365 = vmatpush1.msra.mxu0 0.0
        %366 = vmatprep.subr.mxu0 0.0
        %367 = vmatpush1.msra.mxu0 0.0
        %368 = vmatprep.subr.mxu0 0.0
        %369 = vmatpush1.msra.mxu0 0.0
        %370 = vmatprep.subr.mxu0 0.0
        %371 = vmatpush1.msra.mxu0 0.0
        %372 = vmatprep.subr.mxu0 0.0
        %373 = vmatpush1.msra.mxu0 0.0
        %374 = vmatprep.subr.mxu0 0.0
        %375 = vmatpush1.msra.mxu0 0.0
        %376 = vmatprep.subr.mxu0 0.0
        %377 = vmatpush1.msra.mxu0 0.0
        %378 = vmatprep.subr.mxu0 0.0
        %379 = vmatpush1.msra.mxu0 0.0
        %380 = vmatprep.subr.mxu0 0.0
        %381 = vmatpush1.msra.mxu0 0.0
        %382 = vmatprep.subr.mxu0 0.0
        %383 = vmatpush1.msra.mxu0 0.0
        %384 = vmatprep.subr.mxu0 0.0
        %385 = vmatpush1.msra.mxu0 0.0
        %386 = vmatprep.subr.mxu0 0.0
        %387 = vmatpush1.msra.mxu0 0.0
        %388 = vmatprep.subr.mxu0 0.0
        %389 = vmatpush1.msra.mxu0 0.0
        %390 = vmatprep.subr.mxu0 0.0
        %391 = vmatpush1.msra.mxu0 0.0
        %392 = vmatprep.subr.mxu0 0.0
        %393 = vmatpush1.msra.mxu0 0.0
        %394 = vmatprep.subr.mxu0 0.0
        %395 = vmatpush1.msra.mxu0 0.0
        %396 = vmatprep.subr.mxu0 0.0
        %397 = vmatpush1.msra.mxu0 0.0
        %398 = vmatprep.subr.mxu0 0.0
        %399 = vmatpush1.msra.mxu0 0.0
        %400 = vmatprep.subr.mxu0 0.0
        %401 = vmatpush1.msra.mxu0 0.0
        %402 = vmatprep.subr.mxu0 0.0
        %403 = vmatpush1.msra.mxu0 0.0
        %404 = vmatprep.mubr.f32.mxu0 0.0
        %405 = vmatmul.mubr.f32.gmra.mrb[0].mxu0 %v338
        %v406 = vpop.f32.mrb[0].mxu0
        %v407 = vadd.f32 0.0, %v406
        %v408 = vpop.f32.mrb[0].mxu0
        %409 = vdwg.mxu0
        %v410 = vadd.f32 %v335, %v407
        %v411 = vxor.u32 %v410, 2147483648
        %v412 = vmul.f32 %v411, 1.442695
        %v413 = vpow.pop %v412
        %v414 = vadd.f32 %v413, 1.0
        %v415 = vrcp.pop %v414
        %v416 = vmul.f32 1.0, %v415
        %v417 = vtanh.pop %v410
        %419 = vrot.lane.b32.xlu0 %v312, 32
        %v420 = vpop.permute.xlu0 %419
        %v422 = vmul.f32 %v416, %v420
        %424 = vrot.lane.b32.xlu0 %v417, 32
        %v425 = vpop.permute.xlu0 %424
        %v427 = vmul.f32 %v416, %v425
        %429 = vrot.lane.b32.xlu0 %v427, 32
        %v430 = vpop.permute.xlu0 %429
        %v432 = vadd.f32 %v422, %v430
        %v433 = vtanh.pop %v432
        %435 = vrot.lane.b32.xlu0 %v433, 32
        %v436 = vpop.permute.xlu0 %435
        %v438 = vmul.f32 %v416, %v436
        %440 = vset.pattern.permute.xlu0 0
        %441 = vperm.xlu0 %440, %v314
        %v442 = vpop.permute.xlu0 %441
        %v444 = vmul.f32 %v442, %v326
        %v445 = vadd.f32 %v444, %v333
        %447 = vrot.lane.b32.xlu0 %v438, 64
        %v448 = vpop.permute.xlu0 %447
        %v449 = vsel %vm336, %v448, 0
        %451 = vmatprep.subr.mxu0 0.0
        %452 = vmatpush1.msra.mxu0 %v305
        %453 = vmatprep.subr.mxu0 0.0
        %454 = vmatpush1.msra.mxu0 %v306
        %455 = vmatprep.subr.mxu0 0.0
        %456 = vmatpush1.msra.mxu0 %v307
        %457 = vmatprep.subr.mxu0 0.0
        %458 = vmatpush1.msra.mxu0 %v308
        %459 = vmatprep.subr.mxu0 0.0
        %460 = vmatpush1.msra.mxu0 0.0
        %461 = vmatprep.subr.mxu0 0.0
        %462 = vmatpush1.msra.mxu0 0.0
        %463 = vmatprep.subr.mxu0 0.0
        %464 = vmatpush1.msra.mxu0 0.0
        %465 = vmatprep.subr.mxu0 0.0
        %466 = vmatpush1.msra.mxu0 0.0
        %467 = vmatprep.subr.mxu0 0.0
        %468 = vmatpush1.msra.mxu0 0.0
        %469 = vmatprep.subr.mxu0 0.0
        %470 = vmatpush1.msra.mxu0 0.0
        %471 = vmatprep.subr.mxu0 0.0
        %472 = vmatpush1.msra.mxu0 0.0
        %473 = vmatprep.subr.mxu0 0.0
        %474 = vmatpush1.msra.mxu0 0.0
        %475 = vmatprep.subr.mxu0 0.0
        %476 = vmatpush1.msra.mxu0 0.0
        %477 = vmatprep.subr.mxu0 0.0
        %478 = vmatpush1.msra.mxu0 0.0
        %479 = vmatprep.subr.mxu0 0.0
        %480 = vmatpush1.msra.mxu0 0.0
        %481 = vmatprep.subr.mxu0 0.0
        %482 = vmatpush1.msra.mxu0 0.0
        %483 = vmatprep.subr.mxu0 0.0
        %484 = vmatpush1.msra.mxu0 0.0
        %485 = vmatprep.subr.mxu0 0.0
        %486 = vmatpush1.msra.mxu0 0.0
        %487 = vmatprep.subr.mxu0 0.0
        %488 = vmatpush1.msra.mxu0 0.0
        %489 = vmatprep.subr.mxu0 0.0
        %490 = vmatpush1.msra.mxu0 0.0
        %491 = vmatprep.subr.mxu0 0.0
        %492 = vmatpush1.msra.mxu0 0.0
        %493 = vmatprep.subr.mxu0 0.0
        %494 = vmatpush1.msra.mxu0 0.0
        %495 = vmatprep.subr.mxu0 0.0
        %496 = vmatpush1.msra.mxu0 0.0
        %497 = vmatprep.subr.mxu0 0.0
        %498 = vmatpush1.msra.mxu0 0.0
        %499 = vmatprep.subr.mxu0 0.0
        %500 = vmatpush1.msra.mxu0 0.0
        %501 = vmatprep.subr.mxu0 0.0
        %502 = vmatpush1.msra.mxu0 0.0
        %503 = vmatprep.subr.mxu0 0.0
        %504 = vmatpush1.msra.mxu0 0.0
        %505 = vmatprep.subr.mxu0 0.0
        %506 = vmatpush1.msra.mxu0 0.0
        %507 = vmatprep.subr.mxu0 0.0
        %508 = vmatpush1.msra.mxu0 0.0
        %509 = vmatprep.subr.mxu0 0.0
        %510 = vmatpush1.msra.mxu0 0.0
        %511 = vmatprep.subr.mxu0 0.0
        %512 = vmatpush1.msra.mxu0 0.0
        %513 = vmatprep.subr.mxu0 0.0
        %514 = vmatpush1.msra.mxu0 0.0
        %515 = vmatprep.mubr.f32.mxu0 0.0
        %516 = vmatmul.mubr.f32.gmra.mrb[0].mxu0 %v449
        %v517 = vpop.f32.mrb[0].mxu0
        %v518 = vadd.f32 0.0, %v517
        %v519 = vpop.f32.mrb[0].mxu0
        %520 = vdwg.mxu0
        %v521 = vadd.f32 %v445, %v518
        %v522 = vxor.u32 %v521, 2147483648
        %v523 = vmul.f32 %v522, 1.442695
        %v524 = vpow.pop %v523
        %v525 = vadd.f32 %v524, 1.0
        %v526 = vrcp.pop %v525
        %v527 = vmul.f32 1.0, %v526
        %v528 = vtanh.pop %v521
        %v529 = vmul.f32 %v527, %v432
        %531 = vrot.lane.b32.xlu0 %v528, 32
        %v532 = vpop.permute.xlu0 %531
        %v534 = vmul.f32 %v527, %v532
        %536 = vrot.lane.b32.xlu0 %v534, 32
        %v537 = vpop.permute.xlu0 %536
        %v539 = vadd.f32 %v529, %v537
        %v540 = vtanh.pop %v539
        %542 = vrot.lane.b32.xlu0 %v540, 32
        %v543 = vpop.permute.xlu0 %542
        %v545 = vmul.f32 %v527, %v543
        %547 = vset.pattern.permute.xlu0 0
        %548 = vperm.xlu0 %547, %v315
        %v549 = vpop.permute.xlu0 %548
        %v551 = vmul.f32 %v549, %v326
        %v552 = vadd.f32 %v551, %v333
        %554 = vrot.lane.b32.xlu0 %v545, 64
        %v555 = vpop.permute.xlu0 %554
        %v556 = vsel %vm336, %v555, 0
        %558 = vmatprep.subr.mxu0 0.0
        %559 = vmatpush1.msra.mxu0 %v305
        %560 = vmatprep.subr.mxu0 0.0
        %561 = vmatpush1.msra.mxu0 %v306
        %562 = vmatprep.subr.mxu0 0.0
        %563 = vmatpush1.msra.mxu0 %v307
        %564 = vmatprep.subr.mxu0 0.0
        %565 = vmatpush1.msra.mxu0 %v308
        %566 = vmatprep.subr.mxu0 0.0
        %567 = vmatpush1.msra.mxu0 0.0
        %568 = vmatprep.subr.mxu0 0.0
        %569 = vmatpush1.msra.mxu0 0.0
        %570 = vmatprep.subr.mxu0 0.0
        %571 = vmatpush1.msra.mxu0 0.0
        %572 = vmatprep.subr.mxu0 0.0
        %573 = vmatpush1.msra.mxu0 0.0
        %574 = vmatprep.subr.mxu0 0.0
        %575 = vmatpush1.msra.mxu0 0.0
        %576 = vmatprep.subr.mxu0 0.0
        %577 = vmatpush1.msra.mxu0 0.0
        %578 = vmatprep.subr.mxu0 0.0
        %579 = vmatpush1.msra.mxu0 0.0
        %580 = vmatprep.subr.mxu0 0.0
        %581 = vmatpush1.msra.mxu0 0.0
        %582 = vmatprep.subr.mxu0 0.0
        %583 = vmatpush1.msra.mxu0 0.0
        %584 = vmatprep.subr.mxu0 0.0
        %585 = vmatpush1.msra.mxu0 0.0
        %586 = vmatprep.subr.mxu0 0.0
        %587 = vmatpush1.msra.mxu0 0.0
        %588 = vmatprep.subr.mxu0 0.0
        %589 = vmatpush1.msra.mxu0 0.0
        %590 = vmatprep.subr.mxu0 0.0
        %591 = vmatpush1.msra.mxu0 0.0
        %592 = vmatprep.subr.mxu0 0.0
        %593 = vmatpush1.msra.mxu0 0.0
        %594 = vmatprep.subr.mxu0 0.0
        %595 = vmatpush1.msra.mxu0 0.0
        %596 = vmatprep.subr.mxu0 0.0
        %597 = vmatpush1.msra.mxu0 0.0
        %598 = vmatprep.subr.mxu0 0.0
        %599 = vmatpush1.msra.mxu0 0.0
        %600 = vmatprep.subr.mxu0 0.0
        %601 = vmatpush1.msra.mxu0 0.0
        %602 = vmatprep.subr.mxu0 0.0
        %603 = vmatpush1.msra.mxu0 0.0
        %604 = vmatprep.subr.mxu0 0.0
        %605 = vmatpush1.msra.mxu0 0.0
        %606 = vmatprep.subr.mxu0 0.0
        %607 = vmatpush1.msra.mxu0 0.0
        %608 = vmatprep.subr.mxu0 0.0
        %609 = vmatpush1.msra.mxu0 0.0
        %610 = vmatprep.subr.mxu0 0.0
        %611 = vmatpush1.msra.mxu0 0.0
        %612 = vmatprep.subr.mxu0 0.0
        %613 = vmatpush1.msra.mxu0 0.0
        %614 = vmatprep.subr.mxu0 0.0
        %615 = vmatpush1.msra.mxu0 0.0
        %616 = vmatprep.subr.mxu0 0.0
        %617 = vmatpush1.msra.mxu0 0.0
        %618 = vmatprep.subr.mxu0 0.0
        %619 = vmatpush1.msra.mxu0 0.0
        %620 = vmatprep.subr.mxu0 0.0
        %621 = vmatpush1.msra.mxu0 0.0
        %622 = vmatprep.mubr.f32.mxu0 0.0
        %623 = vmatmul.mubr.f32.gmra.mrb[0].mxu0 %v556
        %v624 = vpop.f32.mrb[0].mxu0
        %v625 = vadd.f32 0.0, %v624
        %v626 = vpop.f32.mrb[0].mxu0
        %627 = vdwg.mxu0
        %v628 = vadd.f32 %v552, %v625
        %v629 = vxor.u32 %v628, 2147483648
        %v630 = vmul.f32 %v629, 1.442695
        %v631 = vpow.pop %v630
        %v632 = vadd.f32 %v631, 1.0
        %v633 = vrcp.pop %v632
        %v634 = vmul.f32 1.0, %v633
        %v635 = vtanh.pop %v628
        %v636 = vmul.f32 %v634, %v539
        %638 = vrot.lane.b32.xlu0 %v635, 32
        %v639 = vpop.permute.xlu0 %638
        %v641 = vmul.f32 %v634, %v639
        %643 = vrot.lane.b32.xlu0 %v641, 32
        %v644 = vpop.permute.xlu0 %643
        %v646 = vadd.f32 %v636, %v644
        %v647 = vtanh.pop %v646
        %649 = vrot.lane.b32.xlu0 %v647, 32
        %v650 = vpop.permute.xlu0 %649
        %v652 = vmul.f32 %v634, %v650
        %654 = vset.pattern.permute.xlu0 0
        %655 = vperm.xlu0 %654, %v316
        %v656 = vpop.permute.xlu0 %655
        %v658 = vmul.f32 %v656, %v326
        %v659 = vadd.f32 %v658, %v333
        %661 = vrot.lane.b32.xlu0 %v652, 64
        %v662 = vpop.permute.xlu0 %661
        %v663 = vsel %vm336, %v662, 0
        %665 = vmatprep.subr.mxu0 0.0
        %666 = vmatpush1.msra.mxu0 %v305
        %667 = vmatprep.subr.mxu0 0.0
        %668 = vmatpush1.msra.mxu0 %v306
        %669 = vmatprep.subr.mxu0 0.0
        %670 = vmatpush1.msra.mxu0 %v307
        %671 = vmatprep.subr.mxu0 0.0
        %672 = vmatpush1.msra.mxu0 %v308
        %673 = vmatprep.subr.mxu0 0.0
        %674 = vmatpush1.msra.mxu0 0.0
        %675 = vmatprep.subr.mxu0 0.0
        %676 = vmatpush1.msra.mxu0 0.0
        %677 = vmatprep.subr.mxu0 0.0
        %678 = vmatpush1.msra.mxu0 0.0
        %679 = vmatprep.subr.mxu0 0.0
        %680 = vmatpush1.msra.mxu0 0.0
        %681 = vmatprep.subr.mxu0 0.0
        %682 = vmatpush1.msra.mxu0 0.0
        %683 = vmatprep.subr.mxu0 0.0
        %684 = vmatpush1.msra.mxu0 0.0
        %685 = vmatprep.subr.mxu0 0.0
        %686 = vmatpush1.msra.mxu0 0.0
        %687 = vmatprep.subr.mxu0 0.0
        %688 = vmatpush1.msra.mxu0 0.0
        %689 = vmatprep.subr.mxu0 0.0
        %690 = vmatpush1.msra.mxu0 0.0
        %691 = vmatprep.subr.mxu0 0.0
        %692 = vmatpush1.msra.mxu0 0.0
        %693 = vmatprep.subr.mxu0 0.0
        %694 = vmatpush1.msra.mxu0 0.0
        %695 = vmatprep.subr.mxu0 0.0
        %696 = vmatpush1.msra.mxu0 0.0
        %697 = vmatprep.subr.mxu0 0.0
        %698 = vmatpush1.msra.mxu0 0.0
        %699 = vmatprep.subr.mxu0 0.0
        %700 = vmatpush1.msra.mxu0 0.0
        %701 = vmatprep.subr.mxu0 0.0
        %702 = vmatpush1.msra.mxu0 0.0
        %703 = vmatprep.subr.mxu0 0.0
        %704 = vmatpush1.msra.mxu0 0.0
        %705 = vmatprep.subr.mxu0 0.0
        %706 = vmatpush1.msra.mxu0 0.0
        %707 = vmatprep.subr.mxu0 0.0
        %708 = vmatpush1.msra.mxu0 0.0
        %709 = vmatprep.subr.mxu0 0.0
        %710 = vmatpush1.msra.mxu0 0.0
        %711 = vmatprep.subr.mxu0 0.0
        %712 = vmatpush1.msra.mxu0 0.0
        %713 = vmatprep.subr.mxu0 0.0
        %714 = vmatpush1.msra.mxu0 0.0
        %715 = vmatprep.subr.mxu0 0.0
        %716 = vmatpush1.msra.mxu0 0.0
        %717 = vmatprep.subr.mxu0 0.0
        %718 = vmatpush1.msra.mxu0 0.0
        %719 = vmatprep.subr.mxu0 0.0
        %720 = vmatpush1.msra.mxu0 0.0
        %721 = vmatprep.subr.mxu0 0.0
        %722 = vmatpush1.msra.mxu0 0.0
        %723 = vmatprep.subr.mxu0 0.0
        %724 = vmatpush1.msra.mxu0 0.0
        %725 = vmatprep.subr.mxu0 0.0
        %726 = vmatpush1.msra.mxu0 0.0
        %727 = vmatprep.subr.mxu0 0.0
        %728 = vmatpush1.msra.mxu0 0.0
        %729 = vmatprep.mubr.f32.mxu0 0.0
        %730 = vmatmul.mubr.f32.gmra.mrb[0].mxu0 %v663
        %v731 = vpop.f32.mrb[0].mxu0
        %v732 = vadd.f32 0.0, %v731
        %v733 = vpop.f32.mrb[0].mxu0
        %734 = vdwg.mxu0
        %v735 = vadd.f32 %v659, %v732
        %v736 = vxor.u32 %v735, 2147483648
        %v737 = vmul.f32 %v736, 1.442695
        %v738 = vpow.pop %v737
        %v739 = vadd.f32 %v738, 1.0
        %v740 = vrcp.pop %v739
        %v741 = vmul.f32 1.0, %v740
        %v742 = vtanh.pop %v735
        %v743 = vmul.f32 %v741, %v646
        %745 = vrot.lane.b32.xlu0 %v742, 32
        %v746 = vpop.permute.xlu0 %745
        %v748 = vmul.f32 %v741, %v746
        %750 = vrot.lane.b32.xlu0 %v748, 32
        %v751 = vpop.permute.xlu0 %750
        %v753 = vadd.f32 %v743, %v751
        %v754 = vtanh.pop %v753
        %756 = vrot.lane.b32.xlu0 %v754, 32
        %v757 = vpop.permute.xlu0 %756
        %v759 = vmul.f32 %v741, %v757
        %761 = vrot.lane.b32.xlu0 %v545, 96
        %v762 = vpop.permute.xlu0 %761
        %765 = vrot.lane.b32.xlu0 %v759, 32
        %v766 = vpop.permute.xlu0 %765
        %v768 = vsel %vm336, %v448, %v762
        %vm769 = vcmask 523264
        %v770 = vsel %vm769, %v768, %v652
        %vm771 = vcmask 785408
        %v772 = vsel %vm771, %v770, %v766
        %773 = vst [vmem:[%s284] sm:$0x3] %v772
        %774 = vrot.lane.b32.xlu0 %v759, 64
        %v775 = vpop.permute.xlu0 %774
        %vm777 = vcmask 254976
        %778 = vst.msk [vmem:[#allocation6] sm:$0x3] %vm777, %v775
        %780 = vrot.lane.b32.xlu0 %v753, 96
        %v781 = vpop.permute.xlu0 %780
        %783 = vst.msk [vmem:[#allocation8] sm:$0x3] %vm777, %v781
        %s784 = sand.u32 %s136, 1
        %s785 = scalar_lea.sflag [#allocation4], %s784
        %s786 = sand.u32 %s136, 1
        %s787 = smul.addr %s786, 2
        %s788 = scalar_lea.vmem [#allocation5], %s787
        // Predicated region
        $region45: #{tpu_custom_call.1} parent=35 // pred_check
          %p789 = pneg %p146
        $region46: #{tpu_custom_call.1} parent=35 // pred_check_branch
          %791 = sbr.rel (%p789) target = $region48
        $region47: #{tpu_custom_call.1} parent=35 // pred_region
          %s793 = ssub.s32 32, 32
          %794 = vsyncadd %s785, %s793
          %s795 = smul.addr %s27, 2
          %s796 = sadd.s32 %s28, %s795
          %s797 = smul.addr %s796, 32
          %s798 = scalar_lea.hbm %s4, %s797
          %s800 = sshll.u32 %s788, 4
          %s801 = int_to_ptr.vmem [resolvable:$true] %s800
          %803 = dma.vmem_to_hbm [thread:$0]  %s801, 32, %s798, %s785
        $region48: #{tpu_custom_call.1} parent=35 // pred_fallthru
          _
        // Predicated region
        $region49: #{tpu_custom_call.1} parent=35 // pred_check
          %p804 = pneg %p172
        $region50: #{tpu_custom_call.1} parent=35 // pred_check_branch
          %806 = sbr.rel (%p804) target = $region52
        $region51: #{tpu_custom_call.1} parent=35 // pred_region
          %s808 = ssub.s32 32, 32
          %809 = vsyncadd [#allocation7], %s808
          %s810 = smul.addr %s27, 32
          %s811 = scalar_lea.hbm %s5, %s810
          %s813 = sshll.u32 [#allocation6], 4
          %s814 = int_to_ptr.vmem [resolvable:$true] %s813
          %816 = dma.vmem_to_hbm [thread:$0]  %s814, 32, %s811, [#allocation7]
        $region52: #{tpu_custom_call.1} parent=35 // pred_fallthru
          _
        // Predicated region
        $region53: #{tpu_custom_call.1} parent=35 // pred_check
          %p817 = pneg %p198
        $region54: #{tpu_custom_call.1} parent=35 // pred_check_branch
          %819 = sbr.rel (%p817) target = $region56
        $region55: #{tpu_custom_call.1} parent=35 // pred_region
          %s821 = ssub.s32 32, 32
          %822 = vsyncadd [#allocation7], %s821
          %s823 = smul.addr %s27, 32
          %s824 = scalar_lea.hbm %s6, %s823
          %s826 = sshll.u32 [#allocation8], 4
          %s827 = int_to_ptr.vmem [resolvable:$true] %s826
          %829 = dma.vmem_to_hbm [thread:$0]  %s827, 32, %s824, [#allocation7]
        $region56: #{tpu_custom_call.1} parent=35 // pred_fallthru
          _
        // Predicated region
        $region57: #{tpu_custom_call.1} parent=35 // pred_check
          %p830 = pneg %p172
        $region58: #{tpu_custom_call.1} parent=35 // pred_check_branch
          %832 = sbr.rel (%p830) target = $region60
        $region59: #{tpu_custom_call.1} parent=35 // pred_region
          %833 = dma.done [#allocation7], 32
        $region60: #{tpu_custom_call.1} parent=35 // pred_fallthru
          _
        // Predicated region
        $region61: #{tpu_custom_call.1} parent=35 // pred_check
          %p834 = pneg %p198
        $region62: #{tpu_custom_call.1} parent=35 // pred_check_branch
          %836 = sbr.rel (%p834) target = $region64
        $region63: #{tpu_custom_call.1} parent=35 // pred_region
          %837 = dma.done [#allocation7], 32
        $region64: #{tpu_custom_call.1} parent=35 // pred_fallthru
          _
      $region36: #{tpu_custom_call.1} parent=5 // pred_fallthru
        _
      %p838 = scmp.le.s32.totalorder 2, %s18
      // Predicated region
      $region65: #{tpu_custom_call.1} parent=5 // pred_check
        %p839 = pneg %p838
      $region66: #{tpu_custom_call.1} parent=5 // pred_check_branch
        %841 = sbr.rel (%p839) target = $region68
      $region67: #{tpu_custom_call.1} parent=5 // pred_region
        %s842 = ssub.s32 %s18, 2
        // Predicated region
        $region69: #{tpu_custom_call.1} parent=67 // pred_check
          %p843 = pneg %p152
        $region70: #{tpu_custom_call.1} parent=67 // pred_check_branch
          %845 = sbr.rel (%p843) target = $region72
        $region71: #{tpu_custom_call.1} parent=67 // pred_region
          %s846 = sand.u32 %s137, 1
          %s847 = scalar_lea.sflag [#allocation4], %s846
          %s848 = sand.u32 %s137, 1
          %s849 = smul.addr %s848, 2
          %s850 = scalar_lea.vmem [#allocation5], %s849
          %851 = dma.done %s847, 32
        $region72: #{tpu_custom_call.1} parent=67 // pred_fallthru
          _
      $region68: #{tpu_custom_call.1} parent=5 // pred_fallthru
        _
    $region6: #{tpu_custom_call.1} parent=1 // loop_footer
      %s22 = sadd.s32 1, %s18
    $region7: #{tpu_custom_call.1} parent=1 // loop_footer_branch
      %17 = sbr.rel target = $region3
    $region8: #{tpu_custom_call.1} parent=1 // loop_exit
      _
    %852 = vsyncpa [#allocation3], 1
    %s853 = scalar_lea.sflag [#allocation3], 1
    %854 = vsyncpa %s853, 1
    %855 = vsyncpa [#allocation4], 1
    %s856 = scalar_lea.sflag [#allocation4], 1
    %857 = vsyncpa %s856, 1
    %858 = vsyncpa [#allocation7], 1

</llo_original>
